<compile_context>
chip_gen: v5e
topology: v5e:2x2
jax: 0.10.0
libtpu: 0.0.40
codegen_flags: <defaults>
</compile_context>

<pallas_src>
import jax
import jax.numpy as jnp
from jax.experimental import pallas as pl
from jax.experimental.pallas import tpu as pltpu


def _moe_kernel(x_ref, w_ref, b_ref, o_ref):
    # x_ref: (3, 1, C, TP)  stacked experts a, b, c for one (batch, pixel-tile)
    # w_ref: (4, C, C)      fc_a, fc_b, fc_c, fuse weights, each (C_out, C_in)
    # b_ref: (C, 4)         matching biases, channels along sublanes
    # o_ref: (1, C, TP)
    a = x_ref[0, 0]                       # (C, TP)
    b = x_ref[1, 0]
    c = x_ref[2, 0]
    bias = b_ref[...]                     # (C, 4)

    # --- expert 1x1 convs: weight (C,C) @ activation (C,TP) on the MXU ---
    wa = jnp.dot(w_ref[0], a, preferred_element_type=jnp.float32) + bias[:, 0:1]
    wb = jnp.dot(w_ref[1], b, preferred_element_type=jnp.float32) + bias[:, 1:2]
    wc = jnp.dot(w_ref[2], c, preferred_element_type=jnp.float32) + bias[:, 2:3]

    # --- softmax over the 3 experts (elementwise across the stacked dim) ---
    m = jnp.maximum(jnp.maximum(wa, wb), wc)
    ea = jnp.exp(wa - m)
    eb = jnp.exp(wb - m)
    ec = jnp.exp(wc - m)
    inv = 1.0 / (ea + eb + ec)

    # --- gated mixture ---
    mix = (a * ea + b * eb + c * ec) * inv

    # --- fuse 1x1 conv + residual ---
    fused = jnp.dot(w_ref[3], mix, preferred_element_type=jnp.float32) + bias[:, 3:4]
    o_ref[0] = (fused + mix).astype(o_ref.dtype)


def _round_up(x, m):
    return (x + m - 1) // m * m


def moe_forward(x, weights, biases, *, max_tile_pixels=2048):
    """MOE forward.

    x:       (S, B, C, H, W) float32, S in {3, 4} (stacked like the torch input)
    weights: (4, C, C)  stacked [fc_a, fc_b, fc_c, fuse], each (C_out, C_in)
    biases:  (C, 4)     matching biases (channels first)
    returns: (B, C, H, W)
    """
    S, B, C, H, W = x.shape
    assert S in (3, 4), "expected a stack of 3 or 4 feature maps"
    abc = x[1:4] if S == 4 else x[0:3]            # (3, B, C, H, W)

    P = H * W
    P_pad = _round_up(P, 128)
    abc = abc.reshape(3, B, C, P)
    if P_pad != P:
        abc = jnp.pad(abc, ((0, 0), (0, 0), (0, 0), (0, P_pad - P)))

    # Pick a lane-dense pixel tile: multiple of 128 that divides P_pad,
    # capped so per-step VMEM stays small (safe across v5e/v6e/v7x).
    lanes = P_pad // 128
    max_lanes = max(1, max_tile_pixels // 128)
    tile_lanes = 1
    for d in range(min(lanes, max_lanes), 0, -1):
        if lanes % d == 0:
            tile_lanes = d
            break
    TP = tile_lanes * 128
    grid = (B, P_pad // TP)

    out = pl.pallas_call(
        _moe_kernel,
        out_shape=jax.ShapeDtypeStruct((B, C, P_pad), jnp.float32),
        grid_spec=pltpu.PrefetchScalarGridSpec(
            num_scalar_prefetch=0,
            grid=grid,
            in_specs=[
                pl.BlockSpec((3, 1, C, TP), lambda bb, pp: (0, bb, 0, pp)),
                pl.BlockSpec((4, C, C), lambda bb, pp: (0, 0, 0)),
                pl.BlockSpec((C, 4), lambda bb, pp: (0, 0)),
            ],
            out_specs=pl.BlockSpec((1, C, TP), lambda bb, pp: (bb, 0, pp)),
        ),
        compiler_params=pltpu.CompilerParams(
            dimension_semantics=("parallel", "parallel")),
    )(abc, weights, biases)

    return out[:, :, :P].reshape(B, C, H, W)


def _reference(x, weights, biases):
    """Pure-JAX reference of the same math (NCHW, high-precision matmuls)."""
    S = x.shape[0]
    a, b, c = (x[1], x[2], x[3]) if S == 4 else (x[0], x[1], x[2])

    def conv1x1(t, wi, bi):
        return jnp.einsum('bchw,dc->bdhw', t, wi,
                          precision=jax.lax.Precision.HIGHEST) \
            + bi[None, :, None, None]

    wa = conv1x1(a, weights[0], biases[:, 0])
    wb = conv1x1(b, weights[1], biases[:, 1])
    wc = conv1x1(c, weights[2], biases[:, 2])
    wm = jax.nn.softmax(jnp.stack([wa, wb, wc], axis=0), axis=0)
    mix = a * wm[0] + b * wm[1] + c * wm[2]
    return conv1x1(mix, weights[3], biases[:, 3]) + mix


if __name__ == "__main__":
    # Small shapes consistent with the module: nf=32 (module default),
    # batch=2, spatial=16x16, 3 stacked expert feature maps.
    S, B, nf, H, W = 3, 2, 32, 16, 16

    key = jax.random.PRNGKey(0)
    kx, kw, kb = jax.random.split(key, 3)
    x = jax.random.normal(kx, (S, B, nf, H, W), dtype=jnp.float32)
    weights = (0.1 * jax.random.normal(kw, (4, nf, nf))).astype(jnp.float32)
    biases = (0.1 * jax.random.normal(kb, (nf, 4))).astype(jnp.float32)

    out = moe_forward(x, weights, biases)
    out = jax.block_until_ready(out)

    ref = _reference(x, weights, biases)
    assert out.shape == (B, nf, H, W)
    err = float(jnp.max(jnp.abs(out - ref)))
    assert jnp.allclose(out, ref, atol=1e-3, rtol=1e-3), err

    print("KERNEL_OK")
</pallas_src>

<mosaic_0001>
module attributes {stable_mosaic.version = 11 : i64} {
  func.func @_moe_kernel(%arg0: i32, %arg1: i32, %arg2: memref<3x1x32x256xf32, #tpu.memory_space<vmem>>, %arg3: memref<4x32x32xf32, #tpu.memory_space<vmem>>, %arg4: memref<32x4xf32, #tpu.memory_space<vmem>>, %arg5: memref<1x32x256xf32, #tpu.memory_space<vmem>>) attributes {dimension_semantics = [#tpu.dimension_semantics<parallel>, #tpu.dimension_semantics<parallel>], iteration_bounds = array<i64: 2, 1>, scalar_prefetch = 0 : i64, scratch_operands = 0 : i64, tpu.core_type = #tpu.core_type<tc>, window_params = [{transform_indices = @transform_0, window_bounds = array<i64: 3, 1, 32, 256>}, {pipeline_mode = #tpu.pipeline_mode<synchronous>, transform_indices = @transform_1, window_bounds = array<i64: 4, 32, 32>}, {pipeline_mode = #tpu.pipeline_mode<synchronous>, transform_indices = @transform_2, window_bounds = array<i64: 32, 4>}, {transform_indices = @transform_3, window_bounds = array<i64: 1, 32, 256>}]} {
    %c0 = arith.constant 0 : index
    %c0_0 = arith.constant 0 : index
    %c0_1 = arith.constant 0 : index
    %c0_2 = arith.constant 0 : index
    %0 = vector.load %arg2[%c0, %c0_0, %c0_1, %c0_2] : memref<3x1x32x256xf32, #tpu.memory_space<vmem>>, vector<1x1x32x256xf32>
    %1 = vector.shape_cast %0 : vector<1x1x32x256xf32> to vector<32x256xf32>
    %c1 = arith.constant 1 : index
    %c0_3 = arith.constant 0 : index
    %c0_4 = arith.constant 0 : index
    %c0_5 = arith.constant 0 : index
    %2 = vector.load %arg2[%c1, %c0_3, %c0_4, %c0_5] : memref<3x1x32x256xf32, #tpu.memory_space<vmem>>, vector<1x1x32x256xf32>
    %3 = vector.shape_cast %2 : vector<1x1x32x256xf32> to vector<32x256xf32>
    %c2 = arith.constant 2 : index
    %c0_6 = arith.constant 0 : index
    %c0_7 = arith.constant 0 : index
    %c0_8 = arith.constant 0 : index
    %4 = vector.load %arg2[%c2, %c0_6, %c0_7, %c0_8] : memref<3x1x32x256xf32, #tpu.memory_space<vmem>>, vector<1x1x32x256xf32>
    %5 = vector.shape_cast %4 : vector<1x1x32x256xf32> to vector<32x256xf32>
    %c0_9 = arith.constant 0 : index
    %c0_10 = arith.constant 0 : index
    %6 = vector.load %arg4[%c0_9, %c0_10] : memref<32x4xf32, #tpu.memory_space<vmem>>, vector<32x4xf32>
    %c0_11 = arith.constant 0 : index
    %c0_12 = arith.constant 0 : index
    %c0_13 = arith.constant 0 : index
    %7 = vector.load %arg3[%c0_11, %c0_12, %c0_13] : memref<4x32x32xf32, #tpu.memory_space<vmem>>, vector<1x32x32xf32>
    %8 = vector.shape_cast %7 : vector<1x32x32xf32> to vector<32x32xf32>
    %cst = arith.constant dense<0.000000e+00> : vector<32x256xf32>
    %9 = tpu.matmul %8, %1, %cst {dimension_numbers = #tpu.dot_dimension_numbers<[1], [0], [0], [1], [0, 0, 1, 1], [], []>} : vector<32x32xf32>, vector<32x256xf32>, vector<32x256xf32> -> vector<32x256xf32>
    %10 = vector.extract_strided_slice %6 {offsets = [0, 0], sizes = [32, 1], strides = [1, 1]} : vector<32x4xf32> to vector<32x1xf32>
    %11 = vector.broadcast %10 : vector<32x1xf32> to vector<32x256xf32>
    %12 = arith.addf %9, %11 : vector<32x256xf32>
    %c1_14 = arith.constant 1 : index
    %c0_15 = arith.constant 0 : index
    %c0_16 = arith.constant 0 : index
    %13 = vector.load %arg3[%c1_14, %c0_15, %c0_16] : memref<4x32x32xf32, #tpu.memory_space<vmem>>, vector<1x32x32xf32>
    %14 = vector.shape_cast %13 : vector<1x32x32xf32> to vector<32x32xf32>
    %cst_17 = arith.constant dense<0.000000e+00> : vector<32x256xf32>
    %15 = tpu.matmul %14, %3, %cst_17 {dimension_numbers = #tpu.dot_dimension_numbers<[1], [0], [0], [1], [0, 0, 1, 1], [], []>} : vector<32x32xf32>, vector<32x256xf32>, vector<32x256xf32> -> vector<32x256xf32>
    %16 = vector.extract_strided_slice %6 {offsets = [0, 1], sizes = [32, 1], strides = [1, 1]} : vector<32x4xf32> to vector<32x1xf32>
    %17 = vector.broadcast %16 : vector<32x1xf32> to vector<32x256xf32>
    %18 = arith.addf %15, %17 : vector<32x256xf32>
    %c2_18 = arith.constant 2 : index
    %c0_19 = arith.constant 0 : index
    %c0_20 = arith.constant 0 : index
    %19 = vector.load %arg3[%c2_18, %c0_19, %c0_20] : memref<4x32x32xf32, #tpu.memory_space<vmem>>, vector<1x32x32xf32>
    %20 = vector.shape_cast %19 : vector<1x32x32xf32> to vector<32x32xf32>
    %cst_21 = arith.constant dense<0.000000e+00> : vector<32x256xf32>
    %21 = tpu.matmul %20, %5, %cst_21 {dimension_numbers = #tpu.dot_dimension_numbers<[1], [0], [0], [1], [0, 0, 1, 1], [], []>} : vector<32x32xf32>, vector<32x256xf32>, vector<32x256xf32> -> vector<32x256xf32>
    %22 = vector.extract_strided_slice %6 {offsets = [0, 2], sizes = [32, 1], strides = [1, 1]} : vector<32x4xf32> to vector<32x1xf32>
    %23 = vector.broadcast %22 : vector<32x1xf32> to vector<32x256xf32>
    %24 = arith.addf %21, %23 : vector<32x256xf32>
    %25 = arith.maximumf %12, %18 : vector<32x256xf32>
    %26 = arith.maximumf %25, %24 : vector<32x256xf32>
    %27 = arith.subf %12, %26 : vector<32x256xf32>
    %28 = math.exp %27 : vector<32x256xf32>
    %29 = arith.subf %18, %26 : vector<32x256xf32>
    %30 = math.exp %29 : vector<32x256xf32>
    %31 = arith.subf %24, %26 : vector<32x256xf32>
    %32 = math.exp %31 : vector<32x256xf32>
    %33 = arith.addf %28, %30 : vector<32x256xf32>
    %34 = arith.addf %33, %32 : vector<32x256xf32>
    %cst_22 = arith.constant 1.000000e+00 : f32
    %35 = vector.broadcast %cst_22 : f32 to vector<32x256xf32>
    %36 = arith.divf %35, %34 : vector<32x256xf32>
    %37 = arith.mulf %1, %28 : vector<32x256xf32>
    %38 = arith.mulf %3, %30 : vector<32x256xf32>
    %39 = arith.addf %37, %38 : vector<32x256xf32>
    %40 = arith.mulf %5, %32 : vector<32x256xf32>
    %41 = arith.addf %39, %40 : vector<32x256xf32>
    %42 = arith.mulf %41, %36 : vector<32x256xf32>
    %c3 = arith.constant 3 : index
    %c0_23 = arith.constant 0 : index
    %c0_24 = arith.constant 0 : index
    %43 = vector.load %arg3[%c3, %c0_23, %c0_24] : memref<4x32x32xf32, #tpu.memory_space<vmem>>, vector<1x32x32xf32>
    %44 = vector.shape_cast %43 : vector<1x32x32xf32> to vector<32x32xf32>
    %cst_25 = arith.constant dense<0.000000e+00> : vector<32x256xf32>
    %45 = tpu.matmul %44, %42, %cst_25 {dimension_numbers = #tpu.dot_dimension_numbers<[1], [0], [0], [1], [0, 0, 1, 1], [], []>} : vector<32x32xf32>, vector<32x256xf32>, vector<32x256xf32> -> vector<32x256xf32>
    %46 = vector.extract_strided_slice %6 {offsets = [0, 3], sizes = [32, 1], strides = [1, 1]} : vector<32x4xf32> to vector<32x1xf32>
    %47 = vector.broadcast %46 : vector<32x1xf32> to vector<32x256xf32>
    %48 = arith.addf %45, %47 : vector<32x256xf32>
    %49 = arith.addf %48, %42 : vector<32x256xf32>
    %c0_26 = arith.constant 0 : index
    %c0_27 = arith.constant 0 : index
    %c0_28 = arith.constant 0 : index
    %50 = vector.load %arg5[%c0_26, %c0_27, %c0_28] : memref<1x32x256xf32, #tpu.memory_space<vmem>>, vector<1x32x256xf32>
    %51 = vector.shape_cast %50 : vector<1x32x256xf32> to vector<32x256xf32>
    %52 = vector.shape_cast %49 : vector<32x256xf32> to vector<1x32x256xf32>
    tpu.vector_store %arg5[%c0_26, %c0_27, %c0_28], %52 {strides = array<i32>} : memref<1x32x256xf32, #tpu.memory_space<vmem>>, vector<1x32x256xf32>,
    return
  }
  func.func @transform_0(%arg0: i32, %arg1: i32) -> (i32, i32, i32, i32) {
    %c0_i32 = arith.constant 0 : i32
    %c0_i32_0 = arith.constant 0 : i32
    %c0_i32_1 = arith.constant 0 : i32
    return %c0_i32, %arg0, %c0_i32_0, %arg1 : i32, i32, i32, i32
  }
  func.func @transform_1(%arg0: i32, %arg1: i32) -> (i32, i32, i32) {
    %c0_i32 = arith.constant 0 : i32
    %c0_i32_0 = arith.constant 0 : i32
    %c0_i32_1 = arith.constant 0 : i32
    %c0_i32_2 = arith.constant 0 : i32
    return %c0_i32, %c0_i32_0, %c0_i32_1 : i32, i32, i32
  }
  func.func @transform_2(%arg0: i32, %arg1: i32) -> (i32, i32) {
    %c0_i32 = arith.constant 0 : i32
    %c0_i32_0 = arith.constant 0 : i32
    %c0_i32_1 = arith.constant 0 : i32
    return %c0_i32, %c0_i32_0 : i32, i32
  }
  func.func @transform_3(%arg0: i32, %arg1: i32) -> (i32, i32, i32) {
    %c0_i32 = arith.constant 0 : i32
    %c0_i32_0 = arith.constant 0 : i32
    return %arg0, %c0_i32, %arg1 : i32, i32, i32
  }
}

</mosaic_0001>

<llo_original>
// kernel: tpu_custom_call.1
$region0: #{tpu_custom_call.1}
  #allocation0 [shape = 'u32[]', space=smem, size = 0x4, offset = 0x4, fixed_abs, tag = 'smem constant byte address 0x4 - core index']
  #allocation1 [shape = 'u32[72,128]{1,0:T(1,128)}', space=vmem, size = 0x9000, scoped, tag = 'internal scratch']
  #allocation8 [shape = 's32[]', space=sflag, size = 0x4, offset = 0, fixed_abs, tag = 'sflag constant byte address 0x0 - dummy sync flag']
  %s0 = inlined_call_operand.hbm [shape: f32[3,2,32,256], index: 0, kind: input, shape index: {}]
  %s1 = inlined_call_operand.hbm [shape: f32[4,32,32], index: 1, kind: input, shape index: {}]
  %s2 = inlined_call_operand.vmem [shape: f32[32,4], index: 2, kind: input, shape index: {}]
  %s3 = inlined_call_operand.hbm [shape: f32[2,32,256], index: 3, kind: output, shape index: {}]
  %s4 = sld [smem:[#allocation0]]
  $region53: #{tpu_custom_call.1} parent=0
    _
  %s6 = ssub.s32 1, %s4
  %s7 = scalar_select 0, %s6, %s4
  $region1: #{tpu_custom_call.1} parent=0
    #allocation2 [shape = 'u8[196608]{0}', space=vmem, size = 0x30000, scoped, tag = 'input window, operand 0']
    #allocation3 [shape = 's32[2]{0}', space=sflag, size = 0x8, scoped, tag = 'scoped memory for tpu_custom_call.1']
    #allocation4 [shape = 's32[2]{0}', space=sflag, size = 0x8, scoped, tag = 'scoped memory for tpu_custom_call.1']
    #allocation5 [shape = 'u8[65536]{0}', space=vmem, size = 0x10000, scoped, tag = 'input window, operand 1, single buffered']
    #allocation6 [shape = 's32[1]{0}', space=sflag, size = 0x4, scoped, tag = 'scoped memory for tpu_custom_call.1']
    #allocation7 [shape = 'u8[65536]{0}', space=vmem, size = 0x10000, scoped, tag = 'output window, operand 0']
    %8 = vsyncpa [#allocation3], 0
    %s9 = scalar_lea.sflag [#allocation3], 1
    %10 = vsyncpa %s9, 0
    %11 = vsyncpa [#allocation6], 0
    %12 = vsyncpa [#allocation4], 0
    %s13 = scalar_lea.sflag [#allocation4], 1
    %14 = vsyncpa %s13, 0
    loop: start=0, step=1, limit=4
    $region2: #{tpu_custom_call.1} parent=1 // loop_pre_header
      _
    $region3: #{tpu_custom_call.1} parent=1 // loop_header
      %s16 = sphi 0, %s20
      %p17 = scmp.ge.s32.totalorder %s16, 4
      %s23 = sphi 0, %s35
      %s24 = sphi 0, %s31
      %s25 = sphi 0, %s23
      %s26 = sphi 0, %s24
      %s27 = sphi 0, %s25
      %s28 = sphi 0, %s26
      %s40 = sphi 0, %s42
      %s43 = sphi 0, %s40
      %s44 = sphi 0, %s43
      %s60 = sphi 0, %s44
      %s64 = sphi 0, %s64
      %s66 = sphi 0, %s64
      %s67 = sphi 0, %s66
      %s81 = sphi 0, %s67
      %s85 = sphi 0, %s85
      %s87 = sphi 0, %s85
      %s88 = sphi 0, %s87
      %s102 = sphi 0, %s88
      %s110 = sphi 0, %s112
      %s113 = sphi 0, %s110
      %s114 = sphi 0, %s113
      %s130 = sphi 0, %s114
    $region4: #{tpu_custom_call.1} parent=1 // loop_header_branch
      %19 = sbr.rel (%p17) target = $region8
    $region5: #{tpu_custom_call.1} parent=1 // loop_body
      %s21 = ssub.s32 %s16, 1
      %s22 = ssub.s32 %s16, 2
      %s29 = sadd.s32 1, %s24
      %p30 = scmp.ge.s32.totalorder %s29, 1
      %s31 = scalar_select %p30, 0, %s29
      %s32 = sadd.s32 1, %s23
      %s33 = scalar_select %p30, %s32, %s23
      %p34 = scmp.ge.s32.totalorder %s33, 2
      %s35 = scalar_select %p34, 0, %s33
      %s36 = ssub.s32 %s23, %s35
      %s37 = ssub.s32 %s24, %s31
      %s38 = sor.u32 %s36, %s37
      %p39 = scmp.eq.s32.totalorder %s38, 0
      %s41 = sadd.s32 %s40, 1
      %s42 = scalar_select %p39, %s40, %s41
      %p45 = pneg %p39
      %p46 = scmp.eq.s32.totalorder %s16, 1
      %p47 = por %p45, %p46
      %p48 = scmp.ne.s32.totalorder %s40, %s43
      %p49 = scmp.eq.s32.totalorder %s16, 0
      %p50 = por %p48, %p49
      %p51 = scmp.ne.s32.totalorder %s40, %s43
      %p52 = scmp.eq.s32.totalorder %s21, 1
      %p53 = por %p51, %p52
      %p54 = scmp.ne.s32.totalorder %s43, %s44
      %p55 = scmp.eq.s32.totalorder %s21, 0
      %p56 = por %p54, %p55
      %p57 = scmp.ne.s32.totalorder %s43, %s44
      %p58 = scmp.eq.s32.totalorder %s22, 1
      %p59 = por %p57, %p58
      %p61 = scmp.ne.s32.totalorder %s44, %s60
      %p62 = scmp.eq.s32.totalorder %s22, 0
      %p63 = por %p61, %p62
      %s65 = sadd.s32 %s64, 1
      %p68 = scmp.eq.s32.totalorder %s16, 1
      %p69 = scmp.ne.s32.totalorder %s64, %s66
      %p70 = scmp.eq.s32.totalorder %s16, 0
      %p71 = por %p69, %p70
      %p72 = scmp.ne.s32.totalorder %s64, %s66
      %p73 = scmp.eq.s32.totalorder %s21, 1
      %p74 = por %p72, %p73
      %p75 = scmp.ne.s32.totalorder %s66, %s67
      %p76 = scmp.eq.s32.totalorder %s21, 0
      %p77 = por %p75, %p76
      %p78 = scmp.ne.s32.totalorder %s66, %s67
      %p79 = scmp.eq.s32.totalorder %s22, 1
      %p80 = por %p78, %p79
      %p82 = scmp.ne.s32.totalorder %s67, %s81
      %p83 = scmp.eq.s32.totalorder %s22, 0
      %p84 = por %p82, %p83
      %s86 = sadd.s32 %s85, 1
      %p89 = scmp.eq.s32.totalorder %s16, 1
      %p90 = scmp.ne.s32.totalorder %s85, %s87
      %p91 = scmp.eq.s32.totalorder %s16, 0
      %p92 = por %p90, %p91
      %p93 = scmp.ne.s32.totalorder %s85, %s87
      %p94 = scmp.eq.s32.totalorder %s21, 1
      %p95 = por %p93, %p94
      %p96 = scmp.ne.s32.totalorder %s87, %s88
      %p97 = scmp.eq.s32.totalorder %s21, 0
      %p98 = por %p96, %p97
      %p99 = scmp.ne.s32.totalorder %s87, %s88
      %p100 = scmp.eq.s32.totalorder %s22, 1
      %p101 = por %p99, %p100
      %p103 = scmp.ne.s32.totalorder %s88, %s102
      %p104 = scmp.eq.s32.totalorder %s22, 0
      %p105 = por %p103, %p104
      %s106 = ssub.s32 %s23, %s35
      %s107 = ssub.s32 %s24, %s31
      %s108 = sor.u32 %s106, %s107
      %p109 = scmp.eq.s32.totalorder %s108, 0
      %s111 = sadd.s32 %s110, 1
      %s112 = scalar_select %p109, %s110, %s111
      %p115 = pneg %p109
      %p116 = scmp.eq.s32.totalorder %s16, 1
      %p117 = por %p115, %p116
      %p118 = scmp.ne.s32.totalorder %s110, %s113
      %p119 = scmp.eq.s32.totalorder %s16, 0
      %p120 = por %p118, %p119
      %p121 = scmp.ne.s32.totalorder %s110, %s113
      %p122 = scmp.eq.s32.totalorder %s21, 1
      %p123 = por %p121, %p122
      %p124 = scmp.ne.s32.totalorder %s113, %s114
      %p125 = scmp.eq.s32.totalorder %s21, 0
      %p126 = por %p124, %p125
      %p127 = scmp.ne.s32.totalorder %s113, %s114
      %p128 = scmp.eq.s32.totalorder %s22, 1
      %p129 = por %p127, %p128
      %p131 = scmp.ne.s32.totalorder %s114, %s130
      %p132 = scmp.eq.s32.totalorder %s22, 0
      %p133 = por %p131, %p132
      %p134 = scmp.le.s32.totalorder 1, %s16
      %p135 = scmp.lt.s32.totalorder %s16, 3
      %p136 = pnand %p134, %p135
      %p137 = pneg %p136
      // Predicated region
      $region9: #{tpu_custom_call.1} parent=5 // pred_check
        _
      $region10: #{tpu_custom_call.1} parent=5 // pred_check_branch
        %139 = sbr.rel (%p136) target = $region12
      $region11: #{tpu_custom_call.1} parent=5 // pred_region
        %s140 = ssub.s32 %s16, 1
        // Predicated region
        $region13: #{tpu_custom_call.1} parent=11 // pred_check
          %p141 = pneg %p77
        $region14: #{tpu_custom_call.1} parent=11 // pred_check_branch
          %143 = sbr.rel (%p141) target = $region16
        $region15: #{tpu_custom_call.1} parent=11 // pred_region
          %145 = vsyncadd [#allocation6], 0
          %s146 = sshll.u32 %s1, 4
          %s147 = int_to_ptr.hbm [resolvable:$true] %s146
          %s148 = sshll.u32 [#allocation5], 4
          %s149 = int_to_ptr.vmem [resolvable:$true] %s148
          %154 = dma.hbm_to_vmem [thread:$0]  %s147, 2048, %s149, [#allocation6], 128, 128, 8
        $region16: #{tpu_custom_call.1} parent=11 // pred_fallthru
          _
        // Predicated region
        $region17: #{tpu_custom_call.1} parent=11 // pred_check
          %p155 = pneg %p98
        $region18: #{tpu_custom_call.1} parent=11 // pred_check_branch
          %157 = sbr.rel (%p155) target = $region20
        $region19: #{tpu_custom_call.1} parent=11 // pred_region
          _
        $region20: #{tpu_custom_call.1} parent=11 // pred_fallthru
          _
      $region12: #{tpu_custom_call.1} parent=5 // pred_fallthru
        _
      %p158 = scmp.lt.s32.totalorder %s16, 2
      // Predicated region
      $region21: #{tpu_custom_call.1} parent=5 // pred_check
        %p159 = pneg %p158
      $region22: #{tpu_custom_call.1} parent=5 // pred_check_branch
        %161 = sbr.rel (%p159) target = $region24
      $region23: #{tpu_custom_call.1} parent=5 // pred_region
        // Predicated region
        $region25: #{tpu_custom_call.1} parent=23 // pred_check
          %p162 = pneg %p50
        $region26: #{tpu_custom_call.1} parent=23 // pred_check_branch
          %164 = sbr.rel (%p162) target = $region28
        $region27: #{tpu_custom_call.1} parent=23 // pred_region
          #allocation9 [shape = 'u32[6]{0}', space=smem, size = 0x18, scoped, tag = 'DMA stride descriptor']
          %s165 = sand.u32 %s40, 1
          %s166 = scalar_lea.sflag [#allocation3], %s165
          %s167 = sand.u32 %s40, 1
          %s168 = smul.addr %s167, 192
          %s169 = scalar_lea.vmem [#allocation2], %s168
          %s170 = smul.u32 2, %s24
          %172 = vsyncadd %s166, 0
          %s173 = smul.addr %s23, 8
          %s174 = sadd.s32 %s170, %s173
          %s175 = smul.addr %s174, 8
          %s176 = scalar_lea.hbm %s0, %s175
          %s178 = sshll.u32 1, 14
          %s179 = sxor.u32 4294967295, %s178
          %s181 = sld [smem:[#allocation0]]
          %s182 = sadd.s32 2, %s181
          %s184 = sshll.u32 7, 26
          %s185 = sxor.u32 4294967295, %s184
          %s186 = sand.u32 0, %s185
          %s187 = sshll.u32 %s182, 26
          %s188 = sor.u32 %s186, %s187
          %s189 = sshll.u32 %s176, 4
          %s190 = int_to_ptr.hbm [resolvable:$true] %s189
          %s191 = sshll.u32 %s169, 4
          %s192 = int_to_ptr.vmem [resolvable:$true] %s191
          %198 = sst [smem:[#allocation9]] 2048
          %s199 = scalar_lea.smem [#allocation9], 1
          %200 = sst [smem:[%s199]] 1024
          %s201 = scalar_lea.smem [#allocation9], 2
          %202 = sst [smem:[%s201]] 4
          %s203 = scalar_lea.smem [#allocation9], 3
          %204 = sst [smem:[%s203]] 256
          %s205 = scalar_lea.smem [#allocation9], 4
          %206 = sst [smem:[%s205]] 256
          %s207 = scalar_lea.smem [#allocation9], 5
          %208 = sst [smem:[%s207]] 16
          %210 = dma.general %s190, 3072, %s192, %s166, [#allocation8], [#allocation9], %s188, 0
        $region28: #{tpu_custom_call.1} parent=23 // pred_fallthru
          _
      $region24: #{tpu_custom_call.1} parent=5 // pred_fallthru
        _
      %p211 = scmp.le.s32.totalorder 1, %s16
      %p212 = scmp.lt.s32.totalorder %s16, 3
      %p213 = pnand %p211, %p212
      %p214 = pneg %p213
      // Predicated region
      $region29: #{tpu_custom_call.1} parent=5 // pred_check
        _
      $region30: #{tpu_custom_call.1} parent=5 // pred_check_branch
        %216 = sbr.rel (%p213) target = $region32
      $region31: #{tpu_custom_call.1} parent=5 // pred_region
        %s217 = ssub.s32 %s16, 1
        %s218 = sand.u32 %s43, 1
        %s219 = scalar_lea.sflag [#allocation3], %s218
        %s220 = sand.u32 %s43, 1
        %s221 = smul.addr %s220, 192
        %s222 = scalar_lea.vmem [#allocation2], %s221
        // Predicated region
        $region33: #{tpu_custom_call.1} parent=31 // pred_check
          %p223 = pneg %p56
        $region34: #{tpu_custom_call.1} parent=31 // pred_check_branch
          %225 = sbr.rel (%p223) target = $region36
        $region35: #{tpu_custom_call.1} parent=31 // pred_region
          %227 = dma.done %s219, 3072
        $region36: #{tpu_custom_call.1} parent=31 // pred_fallthru
          _
        // Predicated region
        $region37: #{tpu_custom_call.1} parent=31 // pred_check
          %p228 = pneg %p77
        $region38: #{tpu_custom_call.1} parent=31 // pred_check_branch
          %230 = sbr.rel (%p228) target = $region40
        $region39: #{tpu_custom_call.1} parent=31 // pred_region
          %232 = dma.done [#allocation6], 2048
        $region40: #{tpu_custom_call.1} parent=31 // pred_fallthru
          _
        %s233 = sand.u32 %s43, 1
        %s234 = scalar_lea.sflag [#allocation3], %s233
        %s235 = sand.u32 %s43, 1
        %s236 = smul.addr %s235, 192
        %s237 = scalar_lea.vmem [#allocation2], %s236
        %p238 = pneg %p56
        %p239 = pneg %p53
        %p240 = pneg %p77
        %p241 = pneg %p74
        %p242 = pneg %p98
        %p243 = pneg %p95
        %p244 = pneg %p126
        %p245 = pneg %p123
        %s246 = sand.u32 %s113, 1
        %s247 = scalar_lea.sflag [#allocation4], %s246
        %s248 = sand.u32 %s113, 1
        %s249 = smul.addr %s248, 64
        %s250 = scalar_lea.vmem [#allocation7], %s249
        %s251 = smul.u32 2, %s26
        %s252 = smul.u32 2, %s26
        %v253 = vld [vmem:[%s222] sm:$0xff]
        %v254 = vld [vmem:[%s222 + $0x8] sm:$0xff]
        %v255 = vld [vmem:[%s222 + $0x10] sm:$0xff]
        %v256 = vld [vmem:[%s222 + $0x18] sm:$0xff]
        %v257 = vld [vmem:[%s222 + $0x20] sm:$0xff]
        %v258 = vld [vmem:[%s222 + $0x28] sm:$0xff]
        %v259 = vld [vmem:[%s222 + $0x30] sm:$0xff]
        %v260 = vld [vmem:[%s222 + $0x38] sm:$0xff]
        %s261 = scalar_lea.vmem %s222, 64 [#allocation2]
        %v262 = vld [vmem:[%s261] sm:$0xff]
        %v263 = vld [vmem:[%s261 + $0x8] sm:$0xff]
        %v264 = vld [vmem:[%s261 + $0x10] sm:$0xff]
        %v265 = vld [vmem:[%s261 + $0x18] sm:$0xff]
        %v266 = vld [vmem:[%s261 + $0x20] sm:$0xff]
        %v267 = vld [vmem:[%s261 + $0x28] sm:$0xff]
        %v268 = vld [vmem:[%s261 + $0x30] sm:$0xff]
        %v269 = vld [vmem:[%s261 + $0x38] sm:$0xff]
        %s270 = scalar_lea.vmem %s222, 128 [#allocation2]
        %v271 = vld [vmem:[%s270] sm:$0xff]
        %v272 = vld [vmem:[%s270 + $0x8] sm:$0xff]
        %v273 = vld [vmem:[%s270 + $0x10] sm:$0xff]
        %v274 = vld [vmem:[%s270 + $0x18] sm:$0xff]
        %v275 = vld [vmem:[%s270 + $0x20] sm:$0xff]
        %v276 = vld [vmem:[%s270 + $0x28] sm:$0xff]
        %v277 = vld [vmem:[%s270 + $0x30] sm:$0xff]
        %v278 = vld [vmem:[%s270 + $0x38] sm:$0xff]
        %v279 = vld [vmem:[%s2] sm:$0xff]
        %v280 = vld [vmem:[%s2 + $0x8] sm:$0xff]
        %v281 = vld [vmem:[%s2 + $0x10] sm:$0xff]
        %v282 = vld [vmem:[%s2 + $0x18] sm:$0xff]
        %v283 = vld [vmem:[#allocation5] sm:$0xff]
        %v284 = vld [vmem:[#allocation5 + $0x8] sm:$0xff]
        %v285 = vld [vmem:[#allocation5 + $0x10] sm:$0xff]
        %v286 = vld [vmem:[#allocation5 + $0x18] sm:$0xff]
        %288 = vset.pattern.permute.xlu0 0
        %289 = vperm.xlu0 %288, %v279
        %v290 = vpop.permute.xlu0 %289
        %293 = vset.pattern.permute.xlu0 0
        %294 = vperm.xlu0 %293, %v280
        %v295 = vpop.permute.xlu0 %294
        %298 = vset.pattern.permute.xlu0 0
        %299 = vperm.xlu0 %298, %v281
        %v300 = vpop.permute.xlu0 %299
        %303 = vset.pattern.permute.xlu0 0
        %304 = vperm.xlu0 %303, %v282
        %v305 = vpop.permute.xlu0 %304
        %vm307 = vcmask 261120
        %v309 = vsel %vm307, %v283, 0
        %v312 = vsel %vm307, %v284, 0
        %v315 = vsel %vm307, %v285, 0
        %v318 = vsel %vm307, %v286, 0
        %320 = vmatpush.msra.mxu0 0.0
        %321 = vmatpush.msra.mxu0 0.0
        %322 = vmatpush.msra.mxu0 0.0
        %323 = vmatpush.msra.mxu0 0.0
        %324 = vmatpush.msra.mxu0 0.0
        %325 = vmatpush.msra.mxu0 0.0
        %326 = vmatpush.msra.mxu0 0.0
        %327 = vmatpush.msra.mxu0 0.0
        %328 = vmatpush.msra.mxu0 0.0
        %329 = vmatpush.msra.mxu0 0.0
        %330 = vmatpush.msra.mxu0 0.0
        %331 = vmatpush.msra.mxu0 0.0
        %332 = vmatpush.msra.mxu0 %v259
        %333 = vmatpush.msra.mxu0 %v257
        %334 = vmatpush.msra.mxu0 %v255
        %335 = vmatpush.msra.mxu0 %v253
        %336 = vmatmul.f32.gmra.mxu0 %v309
        %v337 = vpop.f32.mrf.mxu0
        %v338 = vadd.f32 %v290, %v337
        %339 = vmatmul.f32.gmra.mxu0 %v312
        %v340 = vpop.f32.mrf.mxu0
        %v341 = vadd.f32 %v295, %v340
        %342 = vmatmul.f32.gmra.mxu0 %v315
        %v343 = vpop.f32.mrf.mxu0
        %v344 = vadd.f32 %v300, %v343
        %345 = vmatmul.f32.gmra.mxu0 %v318
        %v346 = vpop.f32.mrf.mxu0
        %v347 = vadd.f32 %v305, %v346
        %348 = vdwg.mxu0
        %349 = vmatpush.msra.mxu0 0.0
        %350 = vmatpush.msra.mxu0 0.0
        %351 = vmatpush.msra.mxu0 0.0
        %352 = vmatpush.msra.mxu0 0.0
        %353 = vmatpush.msra.mxu0 0.0
        %354 = vmatpush.msra.mxu0 0.0
        %355 = vmatpush.msra.mxu0 0.0
        %356 = vmatpush.msra.mxu0 0.0
        %357 = vmatpush.msra.mxu0 0.0
        %358 = vmatpush.msra.mxu0 0.0
        %359 = vmatpush.msra.mxu0 0.0
        %360 = vmatpush.msra.mxu0 0.0
        %361 = vmatpush.msra.mxu0 %v260
        %362 = vmatpush.msra.mxu0 %v258
        %363 = vmatpush.msra.mxu0 %v256
        %364 = vmatpush.msra.mxu0 %v254
        %365 = vmatmul.f32.gmra.mxu0 %v309
        %v366 = vpop.f32.mrf.mxu0
        %v367 = vadd.f32 %v290, %v366
        %368 = vmatmul.f32.gmra.mxu0 %v312
        %v369 = vpop.f32.mrf.mxu0
        %v370 = vadd.f32 %v295, %v369
        %371 = vmatmul.f32.gmra.mxu0 %v315
        %v372 = vpop.f32.mrf.mxu0
        %v373 = vadd.f32 %v300, %v372
        %374 = vmatmul.f32.gmra.mxu0 %v318
        %v375 = vpop.f32.mrf.mxu0
        %v376 = vadd.f32 %v305, %v375
        %377 = vdwg.mxu0
        %s378 = scalar_lea.vmem [#allocation5], 32
        %v379 = vld [vmem:[%s378] sm:$0xff]
        %v380 = vld [vmem:[%s378 + $0x8] sm:$0xff]
        %v381 = vld [vmem:[%s378 + $0x10] sm:$0xff]
        %v382 = vld [vmem:[%s378 + $0x18] sm:$0xff]
        %383 = vset.pattern.permute.xlu0 1
        %384 = vperm.xlu0 %383, %v279
        %v385 = vpop.permute.xlu0 %384
        %387 = vset.pattern.permute.xlu0 1
        %388 = vperm.xlu0 %387, %v280
        %v389 = vpop.permute.xlu0 %388
        %391 = vset.pattern.permute.xlu0 1
        %392 = vperm.xlu0 %391, %v281
        %v393 = vpop.permute.xlu0 %392
        %395 = vset.pattern.permute.xlu0 1
        %396 = vperm.xlu0 %395, %v282
        %v397 = vpop.permute.xlu0 %396
        %v400 = vsel %vm307, %v379, 0
        %v403 = vsel %vm307, %v380, 0
        %v406 = vsel %vm307, %v381, 0
        %v409 = vsel %vm307, %v382, 0
        %411 = vmatpush.msra.mxu0 0.0
        %412 = vmatpush.msra.mxu0 0.0
        %413 = vmatpush.msra.mxu0 0.0
        %414 = vmatpush.msra.mxu0 0.0
        %415 = vmatpush.msra.mxu0 0.0
        %416 = vmatpush.msra.mxu0 0.0
        %417 = vmatpush.msra.mxu0 0.0
        %418 = vmatpush.msra.mxu0 0.0
        %419 = vmatpush.msra.mxu0 0.0
        %420 = vmatpush.msra.mxu0 0.0
        %421 = vmatpush.msra.mxu0 0.0
        %422 = vmatpush.msra.mxu0 0.0
        %423 = vmatpush.msra.mxu0 %v268
        %424 = vmatpush.msra.mxu0 %v266
        %425 = vmatpush.msra.mxu0 %v264
        %426 = vmatpush.msra.mxu0 %v262
        %427 = vmatmul.f32.gmra.mxu0 %v400
        %v428 = vpop.f32.mrf.mxu0
        %v429 = vadd.f32 %v385, %v428
        %430 = vmatmul.f32.gmra.mxu0 %v403
        %v431 = vpop.f32.mrf.mxu0
        %v432 = vadd.f32 %v389, %v431
        %433 = vmatmul.f32.gmra.mxu0 %v406
        %v434 = vpop.f32.mrf.mxu0
        %v435 = vadd.f32 %v393, %v434
        %436 = vmatmul.f32.gmra.mxu0 %v409
        %v437 = vpop.f32.mrf.mxu0
        %v438 = vadd.f32 %v397, %v437
        %439 = vdwg.mxu0
        %440 = vmatpush.msra.mxu0 0.0
        %441 = vmatpush.msra.mxu0 0.0
        %442 = vmatpush.msra.mxu0 0.0
        %443 = vmatpush.msra.mxu0 0.0
        %444 = vmatpush.msra.mxu0 0.0
        %445 = vmatpush.msra.mxu0 0.0
        %446 = vmatpush.msra.mxu0 0.0
        %447 = vmatpush.msra.mxu0 0.0
        %448 = vmatpush.msra.mxu0 0.0
        %449 = vmatpush.msra.mxu0 0.0
        %450 = vmatpush.msra.mxu0 0.0
        %451 = vmatpush.msra.mxu0 0.0
        %452 = vmatpush.msra.mxu0 %v269
        %453 = vmatpush.msra.mxu0 %v267
        %454 = vmatpush.msra.mxu0 %v265
        %455 = vmatpush.msra.mxu0 %v263
        %456 = vmatmul.f32.gmra.mxu0 %v400
        %v457 = vpop.f32.mrf.mxu0
        %v458 = vadd.f32 %v385, %v457
        %459 = vmatmul.f32.gmra.mxu0 %v403
        %v460 = vpop.f32.mrf.mxu0
        %v461 = vadd.f32 %v389, %v460
        %462 = vmatmul.f32.gmra.mxu0 %v406
        %v463 = vpop.f32.mrf.mxu0
        %v464 = vadd.f32 %v393, %v463
        %465 = vmatmul.f32.gmra.mxu0 %v409
        %v466 = vpop.f32.mrf.mxu0
        %v467 = vadd.f32 %v397, %v466
        %468 = vdwg.mxu0
        %s469 = scalar_lea.vmem [#allocation5], 64
        %v470 = vld [vmem:[%s469] sm:$0xff]
        %v471 = vld [vmem:[%s469 + $0x8] sm:$0xff]
        %v472 = vld [vmem:[%s469 + $0x10] sm:$0xff]
        %v473 = vld [vmem:[%s469 + $0x18] sm:$0xff]
        %474 = vset.pattern.permute.xlu0 2
        %475 = vperm.xlu0 %474, %v279
        %v476 = vpop.permute.xlu0 %475
        %478 = vset.pattern.permute.xlu0 2
        %479 = vperm.xlu0 %478, %v280
        %v480 = vpop.permute.xlu0 %479
        %482 = vset.pattern.permute.xlu0 2
        %483 = vperm.xlu0 %482, %v281
        %v484 = vpop.permute.xlu0 %483
        %486 = vset.pattern.permute.xlu0 2
        %487 = vperm.xlu0 %486, %v282
        %v488 = vpop.permute.xlu0 %487
        %v491 = vsel %vm307, %v470, 0
        %v494 = vsel %vm307, %v471, 0
        %v497 = vsel %vm307, %v472, 0
        %v500 = vsel %vm307, %v473, 0
        %502 = vmatpush.msra.mxu0 0.0
        %503 = vmatpush.msra.mxu0 0.0
        %504 = vmatpush.msra.mxu0 0.0
        %505 = vmatpush.msra.mxu0 0.0
        %506 = vmatpush.msra.mxu0 0.0
        %507 = vmatpush.msra.mxu0 0.0
        %508 = vmatpush.msra.mxu0 0.0
        %509 = vmatpush.msra.mxu0 0.0
        %510 = vmatpush.msra.mxu0 0.0
        %511 = vmatpush.msra.mxu0 0.0
        %512 = vmatpush.msra.mxu0 0.0
        %513 = vmatpush.msra.mxu0 0.0
        %514 = vmatpush.msra.mxu0 %v277
        %515 = vmatpush.msra.mxu0 %v275
        %516 = vmatpush.msra.mxu0 %v273
        %517 = vmatpush.msra.mxu0 %v271
        %518 = vmatmul.f32.gmra.mxu0 %v491
        %v519 = vpop.f32.mrf.mxu0
        %v520 = vadd.f32 %v476, %v519
        %521 = vmatmul.f32.gmra.mxu0 %v494
        %v522 = vpop.f32.mrf.mxu0
        %v523 = vadd.f32 %v480, %v522
        %524 = vmatmul.f32.gmra.mxu0 %v497
        %v525 = vpop.f32.mrf.mxu0
        %v526 = vadd.f32 %v484, %v525
        %527 = vmatmul.f32.gmra.mxu0 %v500
        %v528 = vpop.f32.mrf.mxu0
        %v529 = vadd.f32 %v488, %v528
        %530 = vdwg.mxu0
        %531 = vmatpush.msra.mxu0 0.0
        %532 = vmatpush.msra.mxu0 0.0
        %533 = vmatpush.msra.mxu0 0.0
        %534 = vmatpush.msra.mxu0 0.0
        %535 = vmatpush.msra.mxu0 0.0
        %536 = vmatpush.msra.mxu0 0.0
        %537 = vmatpush.msra.mxu0 0.0
        %538 = vmatpush.msra.mxu0 0.0
        %539 = vmatpush.msra.mxu0 0.0
        %540 = vmatpush.msra.mxu0 0.0
        %541 = vmatpush.msra.mxu0 0.0
        %542 = vmatpush.msra.mxu0 0.0
        %543 = vmatpush.msra.mxu0 %v278
        %544 = vmatpush.msra.mxu0 %v276
        %545 = vmatpush.msra.mxu0 %v274
        %546 = vmatpush.msra.mxu0 %v272
        %547 = vmatmul.f32.gmra.mxu0 %v491
        %v548 = vpop.f32.mrf.mxu0
        %v549 = vadd.f32 %v476, %v548
        %550 = vmatmul.f32.gmra.mxu0 %v494
        %v551 = vpop.f32.mrf.mxu0
        %v552 = vadd.f32 %v480, %v551
        %553 = vmatmul.f32.gmra.mxu0 %v497
        %v554 = vpop.f32.mrf.mxu0
        %v555 = vadd.f32 %v484, %v554
        %556 = vmatmul.f32.gmra.mxu0 %v500
        %v557 = vpop.f32.mrf.mxu0
        %v558 = vadd.f32 %v488, %v557
        %559 = vdwg.mxu0
        %v560 = vmax.f32 %v338, %v429
        %v561 = vmax.f32 %v367, %v458
        %v562 = vmax.f32 %v341, %v432
        %v563 = vmax.f32 %v370, %v461
        %v564 = vmax.f32 %v344, %v435
        %v565 = vmax.f32 %v373, %v464
        %v566 = vmax.f32 %v347, %v438
        %v567 = vmax.f32 %v376, %v467
        %v568 = vmax.f32 %v560, %v520
        %v569 = vmax.f32 %v561, %v549
        %v570 = vmax.f32 %v562, %v523
        %v571 = vmax.f32 %v563, %v552
        %v572 = vmax.f32 %v564, %v526
        %v573 = vmax.f32 %v565, %v555
        %v574 = vmax.f32 %v566, %v529
        %v575 = vmax.f32 %v567, %v558
        %v576 = vsub.f32 %v338, %v568
        %v577 = vsub.f32 %v367, %v569
        %v578 = vsub.f32 %v341, %v570
        %v579 = vsub.f32 %v370, %v571
        %v580 = vsub.f32 %v344, %v572
        %v581 = vsub.f32 %v373, %v573
        %v582 = vsub.f32 %v347, %v574
        %v583 = vsub.f32 %v376, %v575
        %v584 = vmul.f32 %v576, 1.442695
        %v585 = vpow.pop %v584
        %v586 = vmul.f32 %v577, 1.442695
        %v587 = vpow.pop %v586
        %v588 = vmul.f32 %v578, 1.442695
        %v589 = vpow.pop %v588
        %v590 = vmul.f32 %v579, 1.442695
        %v591 = vpow.pop %v590
        %v592 = vmul.f32 %v580, 1.442695
        %v593 = vpow.pop %v592
        %v594 = vmul.f32 %v581, 1.442695
        %v595 = vpow.pop %v594
        %v596 = vmul.f32 %v582, 1.442695
        %v597 = vpow.pop %v596
        %v598 = vmul.f32 %v583, 1.442695
        %v599 = vpow.pop %v598
        %v600 = vsub.f32 %v429, %v568
        %v601 = vsub.f32 %v458, %v569
        %v602 = vsub.f32 %v432, %v570
        %v603 = vsub.f32 %v461, %v571
        %v604 = vsub.f32 %v435, %v572
        %v605 = vsub.f32 %v464, %v573
        %v606 = vsub.f32 %v438, %v574
        %v607 = vsub.f32 %v467, %v575
        %v608 = vmul.f32 %v600, 1.442695
        %v609 = vpow.pop %v608
        %v610 = vmul.f32 %v601, 1.442695
        %v611 = vpow.pop %v610
        %v612 = vmul.f32 %v602, 1.442695
        %v613 = vpow.pop %v612
        %v614 = vmul.f32 %v603, 1.442695
        %v615 = vpow.pop %v614
        %v616 = vmul.f32 %v604, 1.442695
        %v617 = vpow.pop %v616
        %v618 = vmul.f32 %v605, 1.442695
        %v619 = vpow.pop %v618
        %v620 = vmul.f32 %v606, 1.442695
        %v621 = vpow.pop %v620
        %v622 = vmul.f32 %v607, 1.442695
        %v623 = vpow.pop %v622
        %v624 = vsub.f32 %v520, %v568
        %v625 = vsub.f32 %v549, %v569
        %v626 = vsub.f32 %v523, %v570
        %v627 = vsub.f32 %v552, %v571
        %v628 = vsub.f32 %v526, %v572
        %v629 = vsub.f32 %v555, %v573
        %v630 = vsub.f32 %v529, %v574
        %v631 = vsub.f32 %v558, %v575
        %v632 = vmul.f32 %v624, 1.442695
        %v633 = vpow.pop %v632
        %v634 = vmul.f32 %v625, 1.442695
        %v635 = vpow.pop %v634
        %v636 = vmul.f32 %v626, 1.442695
        %v637 = vpow.pop %v636
        %v638 = vmul.f32 %v627, 1.442695
        %v639 = vpow.pop %v638
        %v640 = vmul.f32 %v628, 1.442695
        %v641 = vpow.pop %v640
        %v642 = vmul.f32 %v629, 1.442695
        %v643 = vpow.pop %v642
        %v644 = vmul.f32 %v630, 1.442695
        %v645 = vpow.pop %v644
        %v646 = vmul.f32 %v631, 1.442695
        %v647 = vpow.pop %v646
        %v648 = vadd.f32 %v585, %v609
        %v649 = vadd.f32 %v587, %v611
        %v650 = vadd.f32 %v589, %v613
        %v651 = vadd.f32 %v591, %v615
        %v652 = vadd.f32 %v593, %v617
        %v653 = vadd.f32 %v595, %v619
        %v654 = vadd.f32 %v597, %v621
        %v655 = vadd.f32 %v599, %v623
        %v656 = vadd.f32 %v648, %v633
        %v657 = vadd.f32 %v649, %v635
        %v658 = vadd.f32 %v650, %v637
        %v659 = vadd.f32 %v651, %v639
        %v660 = vadd.f32 %v652, %v641
        %v661 = vadd.f32 %v653, %v643
        %v662 = vadd.f32 %v654, %v645
        %v663 = vadd.f32 %v655, %v647
        %v664 = vrcp.pop %v656
        %v665 = vmul.f32 %v656, %v664
        %v666 = vsub.f32 1.0, %v665
        %v667 = vmul.f32 %v664, %v666
        %v668 = vadd.f32 %v664, %v667
        %vm669 = vweird.f32 %v656
        %vm670 = vweird.f32 %v664
        %vm671 = vmor %vm669, %vm670
        %v672 = vsel %vm671, %v664, %v668
        %v673 = vand.u32 2147483647, %v656
        %vm674 = vcmp.eq.f32.partialorder %v673, 8.507059e+37
        %v675 = vand.u32 %v656, 2147483648
        %v676 = vor.u32 1.1754944e-38, %v675
        %v677 = vsel %vm674, %v676, %v672
        %v678 = vmul.f32 1.0, %v677
        %v679 = vrcp.pop %v657
        %v680 = vmul.f32 %v657, %v679
        %v681 = vsub.f32 1.0, %v680
        %v682 = vmul.f32 %v679, %v681
        %v683 = vadd.f32 %v679, %v682
        %vm684 = vweird.f32 %v657
        %vm685 = vweird.f32 %v679
        %vm686 = vmor %vm684, %vm685
        %v687 = vsel %vm686, %v679, %v683
        %v688 = vand.u32 2147483647, %v657
        %vm689 = vcmp.eq.f32.partialorder %v688, 8.507059e+37
        %v690 = vand.u32 %v657, 2147483648
        %v691 = vor.u32 1.1754944e-38, %v690
        %v692 = vsel %vm689, %v691, %v687
        %v693 = vmul.f32 1.0, %v692
        %v694 = vrcp.pop %v658
        %v695 = vmul.f32 %v658, %v694
        %v696 = vsub.f32 1.0, %v695
        %v697 = vmul.f32 %v694, %v696
        %v698 = vadd.f32 %v694, %v697
        %vm699 = vweird.f32 %v658
        %vm700 = vweird.f32 %v694
        %vm701 = vmor %vm699, %vm700
        %v702 = vsel %vm701, %v694, %v698
        %v703 = vand.u32 2147483647, %v658
        %vm704 = vcmp.eq.f32.partialorder %v703, 8.507059e+37
        %v705 = vand.u32 %v658, 2147483648
        %v706 = vor.u32 1.1754944e-38, %v705
        %v707 = vsel %vm704, %v706, %v702
        %v708 = vmul.f32 1.0, %v707
        %v709 = vrcp.pop %v659
        %v710 = vmul.f32 %v659, %v709
        %v711 = vsub.f32 1.0, %v710
        %v712 = vmul.f32 %v709, %v711
        %v713 = vadd.f32 %v709, %v712
        %vm714 = vweird.f32 %v659
        %vm715 = vweird.f32 %v709
        %vm716 = vmor %vm714, %vm715
        %v717 = vsel %vm716, %v709, %v713
        %v718 = vand.u32 2147483647, %v659
        %vm719 = vcmp.eq.f32.partialorder %v718, 8.507059e+37
        %v720 = vand.u32 %v659, 2147483648
        %v721 = vor.u32 1.1754944e-38, %v720
        %v722 = vsel %vm719, %v721, %v717
        %v723 = vmul.f32 1.0, %v722
        %v724 = vrcp.pop %v660
        %v725 = vmul.f32 %v660, %v724
        %v726 = vsub.f32 1.0, %v725
        %v727 = vmul.f32 %v724, %v726
        %v728 = vadd.f32 %v724, %v727
        %vm729 = vweird.f32 %v660
        %vm730 = vweird.f32 %v724
        %vm731 = vmor %vm729, %vm730
        %v732 = vsel %vm731, %v724, %v728
        %v733 = vand.u32 2147483647, %v660
        %vm734 = vcmp.eq.f32.partialorder %v733, 8.507059e+37
        %v735 = vand.u32 %v660, 2147483648
        %v736 = vor.u32 1.1754944e-38, %v735
        %v737 = vsel %vm734, %v736, %v732
        %v738 = vmul.f32 1.0, %v737
        %v739 = vrcp.pop %v661
        %v740 = vmul.f32 %v661, %v739
        %v741 = vsub.f32 1.0, %v740
        %v742 = vmul.f32 %v739, %v741
        %v743 = vadd.f32 %v739, %v742
        %vm744 = vweird.f32 %v661
        %vm745 = vweird.f32 %v739
        %vm746 = vmor %vm744, %vm745
        %v747 = vsel %vm746, %v739, %v743
        %v748 = vand.u32 2147483647, %v661
        %vm749 = vcmp.eq.f32.partialorder %v748, 8.507059e+37
        %v750 = vand.u32 %v661, 2147483648
        %v751 = vor.u32 1.1754944e-38, %v750
        %v752 = vsel %vm749, %v751, %v747
        %v753 = vmul.f32 1.0, %v752
        %v754 = vrcp.pop %v662
        %v755 = vmul.f32 %v662, %v754
        %v756 = vsub.f32 1.0, %v755
        %v757 = vmul.f32 %v754, %v756
        %v758 = vadd.f32 %v754, %v757
        %vm759 = vweird.f32 %v662
        %vm760 = vweird.f32 %v754
        %vm761 = vmor %vm759, %vm760
        %v762 = vsel %vm761, %v754, %v758
        %v763 = vand.u32 2147483647, %v662
        %vm764 = vcmp.eq.f32.partialorder %v763, 8.507059e+37
        %v765 = vand.u32 %v662, 2147483648
        %v766 = vor.u32 1.1754944e-38, %v765
        %v767 = vsel %vm764, %v766, %v762
        %v768 = vmul.f32 1.0, %v767
        %v769 = vrcp.pop %v663
        %v770 = vmul.f32 %v663, %v769
        %v771 = vsub.f32 1.0, %v770
        %v772 = vmul.f32 %v769, %v771
        %v773 = vadd.f32 %v769, %v772
        %vm774 = vweird.f32 %v663
        %vm775 = vweird.f32 %v769
        %vm776 = vmor %vm774, %vm775
        %v777 = vsel %vm776, %v769, %v773
        %v778 = vand.u32 2147483647, %v663
        %vm779 = vcmp.eq.f32.partialorder %v778, 8.507059e+37
        %v780 = vand.u32 %v663, 2147483648
        %v781 = vor.u32 1.1754944e-38, %v780
        %v782 = vsel %vm779, %v781, %v777
        %v783 = vmul.f32 1.0, %v782
        %v784 = vmul.f32 %v253, %v585
        %v785 = vmul.f32 %v254, %v587
        %v786 = vmul.f32 %v255, %v589
        %v787 = vmul.f32 %v256, %v591
        %v788 = vmul.f32 %v257, %v593
        %v789 = vmul.f32 %v258, %v595
        %v790 = vmul.f32 %v259, %v597
        %v791 = vmul.f32 %v260, %v599
        %v792 = vmul.f32 %v262, %v609
        %v793 = vmul.f32 %v263, %v611
        %v794 = vmul.f32 %v264, %v613
        %v795 = vmul.f32 %v265, %v615
        %v796 = vmul.f32 %v266, %v617
        %v797 = vmul.f32 %v267, %v619
        %v798 = vmul.f32 %v268, %v621
        %v799 = vmul.f32 %v269, %v623
        %v800 = vadd.f32 %v784, %v792
        %v801 = vadd.f32 %v785, %v793
        %v802 = vadd.f32 %v786, %v794
        %v803 = vadd.f32 %v787, %v795
        %v804 = vadd.f32 %v788, %v796
        %v805 = vadd.f32 %v789, %v797
        %v806 = vadd.f32 %v790, %v798
        %v807 = vadd.f32 %v791, %v799
        %v808 = vmul.f32 %v271, %v633
        %v809 = vmul.f32 %v272, %v635
        %v810 = vmul.f32 %v273, %v637
        %v811 = vmul.f32 %v274, %v639
        %v812 = vmul.f32 %v275, %v641
        %v813 = vmul.f32 %v276, %v643
        %v814 = vmul.f32 %v277, %v645
        %v815 = vmul.f32 %v278, %v647
        %v816 = vadd.f32 %v800, %v808
        %v817 = vadd.f32 %v801, %v809
        %v818 = vadd.f32 %v802, %v810
        %v819 = vadd.f32 %v803, %v811
        %v820 = vadd.f32 %v804, %v812
        %v821 = vadd.f32 %v805, %v813
        %v822 = vadd.f32 %v806, %v814
        %v823 = vadd.f32 %v807, %v815
        %v824 = vmul.f32 %v816, %v678
        %v825 = vmul.f32 %v817, %v693
        %v826 = vmul.f32 %v818, %v708
        %v827 = vmul.f32 %v819, %v723
        %v828 = vmul.f32 %v820, %v738
        %v829 = vmul.f32 %v821, %v753
        %v830 = vmul.f32 %v822, %v768
        %v831 = vmul.f32 %v823, %v783
        %s832 = scalar_lea.vmem [#allocation5], 96
        %v833 = vld [vmem:[%s832] sm:$0xff]
        %v834 = vld [vmem:[%s832 + $0x8] sm:$0xff]
        %v835 = vld [vmem:[%s832 + $0x10] sm:$0xff]
        %v836 = vld [vmem:[%s832 + $0x18] sm:$0xff]
        %837 = vset.pattern.permute.xlu0 3
        %838 = vperm.xlu0 %837, %v279
        %v839 = vpop.permute.xlu0 %838
        %841 = vset.pattern.permute.xlu0 3
        %842 = vperm.xlu0 %841, %v280
        %v843 = vpop.permute.xlu0 %842
        %845 = vset.pattern.permute.xlu0 3
        %846 = vperm.xlu0 %845, %v281
        %v847 = vpop.permute.xlu0 %846
        %849 = vset.pattern.permute.xlu0 3
        %850 = vperm.xlu0 %849, %v282
        %v851 = vpop.permute.xlu0 %850
        %v854 = vsel %vm307, %v833, 0
        %v857 = vsel %vm307, %v834, 0
        %v860 = vsel %vm307, %v835, 0
        %v863 = vsel %vm307, %v836, 0
        %865 = vmatpush.msra.mxu0 0.0
        %866 = vmatpush.msra.mxu0 0.0
        %867 = vmatpush.msra.mxu0 0.0
        %868 = vmatpush.msra.mxu0 0.0
        %869 = vmatpush.msra.mxu0 0.0
        %870 = vmatpush.msra.mxu0 0.0
        %871 = vmatpush.msra.mxu0 0.0
        %872 = vmatpush.msra.mxu0 0.0
        %873 = vmatpush.msra.mxu0 0.0
        %874 = vmatpush.msra.mxu0 0.0
        %875 = vmatpush.msra.mxu0 0.0
        %876 = vmatpush.msra.mxu0 0.0
        %877 = vmatpush.msra.mxu0 %v830
        %878 = vmatpush.msra.mxu0 %v828
        %879 = vmatpush.msra.mxu0 %v826
        %880 = vmatpush.msra.mxu0 %v824
        %881 = vmatmul.f32.gmra.mxu0 %v854
        %v882 = vpop.f32.mrf.mxu0
        %v883 = vadd.f32 %v839, %v882
        %884 = vmatmul.f32.gmra.mxu0 %v857
        %v885 = vpop.f32.mrf.mxu0
        %v886 = vadd.f32 %v843, %v885
        %887 = vmatmul.f32.gmra.mxu0 %v860
        %v888 = vpop.f32.mrf.mxu0
        %v889 = vadd.f32 %v847, %v888
        %890 = vmatmul.f32.gmra.mxu0 %v863
        %v891 = vpop.f32.mrf.mxu0
        %v892 = vadd.f32 %v851, %v891
        %893 = vdwg.mxu0
        %894 = vmatpush.msra.mxu0 0.0
        %895 = vmatpush.msra.mxu0 0.0
        %896 = vmatpush.msra.mxu0 0.0
        %897 = vmatpush.msra.mxu0 0.0
        %898 = vmatpush.msra.mxu0 0.0
        %899 = vmatpush.msra.mxu0 0.0
        %900 = vmatpush.msra.mxu0 0.0
        %901 = vmatpush.msra.mxu0 0.0
        %902 = vmatpush.msra.mxu0 0.0
        %903 = vmatpush.msra.mxu0 0.0
        %904 = vmatpush.msra.mxu0 0.0
        %905 = vmatpush.msra.mxu0 0.0
        %906 = vmatpush.msra.mxu0 %v831
        %907 = vmatpush.msra.mxu0 %v829
        %908 = vmatpush.msra.mxu0 %v827
        %909 = vmatpush.msra.mxu0 %v825
        %910 = vmatmul.f32.gmra.mxu0 %v854
        %v911 = vpop.f32.mrf.mxu0
        %v912 = vadd.f32 %v839, %v911
        %913 = vmatmul.f32.gmra.mxu0 %v857
        %v914 = vpop.f32.mrf.mxu0
        %v915 = vadd.f32 %v843, %v914
        %916 = vmatmul.f32.gmra.mxu0 %v860
        %v917 = vpop.f32.mrf.mxu0
        %v918 = vadd.f32 %v847, %v917
        %919 = vmatmul.f32.gmra.mxu0 %v863
        %v920 = vpop.f32.mrf.mxu0
        %v921 = vadd.f32 %v851, %v920
        %922 = vdwg.mxu0
        %v923 = vadd.f32 %v883, %v824
        %v924 = vadd.f32 %v912, %v825
        %v925 = vadd.f32 %v886, %v826
        %v926 = vadd.f32 %v915, %v827
        %v927 = vadd.f32 %v889, %v828
        %v928 = vadd.f32 %v918, %v829
        %v929 = vadd.f32 %v892, %v830
        %v930 = vadd.f32 %v921, %v831
        %931 = vst [vmem:[%s250] sm:$0xff] %v923
        %932 = vst [vmem:[%s250 + $0x8] sm:$0xff] %v924
        %933 = vst [vmem:[%s250 + $0x10] sm:$0xff] %v925
        %934 = vst [vmem:[%s250 + $0x18] sm:$0xff] %v926
        %935 = vst [vmem:[%s250 + $0x20] sm:$0xff] %v927
        %936 = vst [vmem:[%s250 + $0x28] sm:$0xff] %v928
        %937 = vst [vmem:[%s250 + $0x30] sm:$0xff] %v929
        %938 = vst [vmem:[%s250 + $0x38] sm:$0xff] %v930
        %s939 = sand.u32 %s113, 1
        %s940 = scalar_lea.sflag [#allocation4], %s939
        %s941 = sand.u32 %s113, 1
        %s942 = smul.addr %s941, 64
        %s943 = scalar_lea.vmem [#allocation7], %s942
        // Predicated region
        $region41: #{tpu_custom_call.1} parent=31 // pred_check
          %p944 = pneg %p123
        $region42: #{tpu_custom_call.1} parent=31 // pred_check_branch
          %946 = sbr.rel (%p944) target = $region44
        $region43: #{tpu_custom_call.1} parent=31 // pred_region
          %s947 = smul.u32 2, %s26
          %949 = vsyncadd %s940, 0
          %s950 = smul.addr %s25, 8
          %s951 = sadd.s32 %s947, %s950
          %s952 = smul.addr %s951, 8
          %s953 = scalar_lea.hbm %s3, %s952
          %s954 = sshll.u32 %s943, 4
          %s955 = int_to_ptr.vmem [resolvable:$true] %s954
          %s956 = sshll.u32 %s953, 4
          %s957 = int_to_ptr.hbm [resolvable:$true] %s956
          %962 = dma.vmem_to_hbm [thread:$0]  %s955, 1024, %s957, %s940, 256, 256, 16
        $region44: #{tpu_custom_call.1} parent=31 // pred_fallthru
          _
      $region32: #{tpu_custom_call.1} parent=5 // pred_fallthru
        _
      %p963 = scmp.le.s32.totalorder 2, %s16
      // Predicated region
      $region45: #{tpu_custom_call.1} parent=5 // pred_check
        %p964 = pneg %p963
      $region46: #{tpu_custom_call.1} parent=5 // pred_check_branch
        %966 = sbr.rel (%p964) target = $region48
      $region47: #{tpu_custom_call.1} parent=5 // pred_region
        %s967 = ssub.s32 %s16, 2
        // Predicated region
        $region49: #{tpu_custom_call.1} parent=47 // pred_check
          %p968 = pneg %p129
        $region50: #{tpu_custom_call.1} parent=47 // pred_check_branch
          %970 = sbr.rel (%p968) target = $region52
        $region51: #{tpu_custom_call.1} parent=47 // pred_region
          %s971 = sand.u32 %s114, 1
          %s972 = scalar_lea.sflag [#allocation4], %s971
          %s973 = sand.u32 %s114, 1
          %s974 = smul.addr %s973, 64
          %s975 = scalar_lea.vmem [#allocation7], %s974
          %977 = dma.done %s972, 1024
        $region52: #{tpu_custom_call.1} parent=47 // pred_fallthru
          _
      $region48: #{tpu_custom_call.1} parent=5 // pred_fallthru
        _
    $region6: #{tpu_custom_call.1} parent=1 // loop_footer
      %s20 = sadd.s32 1, %s16
    $region7: #{tpu_custom_call.1} parent=1 // loop_footer_branch
      %15 = sbr.rel target = $region3
    $region8: #{tpu_custom_call.1} parent=1 // loop_exit
      _
    %978 = vsyncpa [#allocation3], 1
    %s979 = scalar_lea.sflag [#allocation3], 1
    %980 = vsyncpa %s979, 1
    %981 = vsyncpa [#allocation6], 1
    %982 = vsyncpa [#allocation4], 1
    %s983 = scalar_lea.sflag [#allocation4], 1
    %984 = vsyncpa %s983, 1

</llo_original>
